<compile_context>
chip_gen: v5e
topology: v5e:2x2
jax: 0.10.0
libtpu: 0.0.40
codegen_flags: <defaults>
</compile_context>

<pallas_src>
import math
import functools
from typing import NamedTuple, Optional

import jax
import jax.numpy as jnp
from jax.experimental import pallas as pl
from jax.experimental.pallas import tpu as pltpu

_MiB = 1024 * 1024


def _round_up(x, m):
    return (x + m - 1) // m * m


def _default_vmem_limit_bytes():
    """Generation-aware scoped-VMEM limit (v5e/v6e: 96 MiB, v7x: 48 MiB)."""
    try:
        cap = pltpu.get_tpu_info().vmem_capacity_bytes
    except Exception:
        cap = 64 * _MiB
    return int(min(cap * 3 // 4, 96 * _MiB))


def _plan_tiles(num_nodes, tm, tk, max_pad_frac=0.125):
    """Pick (n_p, TM, TK): multiples of 128, TM|n_p, TK|n_p, padding kept small
    (no power-of-2 blowup of the node dimension)."""
    assert tm % 128 == 0 and tk % 128 == 0
    n_base = _round_up(num_nodes, 128)
    # TK: largest multiple of 128 (<= tk) whose padding overhead stays bounded.
    TK = min(tk, n_base)
    while TK > 128 and (_round_up(n_base, TK) - n_base) > max_pad_frac * n_base:
        TK -= 128
    n_p = _round_up(n_base, TK)
    # TM: largest multiple of 128 (<= tm) dividing n_p.
    TM = min(tm, n_p)
    while n_p % TM != 0:
        TM -= 128
    # Megacore (v7x, 2 TCs): make sure the "parallel" row axis has >= 2 tiles.
    if n_p // TM < 2 and n_p >= 256:
        half = n_p // 2
        TM = half if half % 128 == 0 else 128
    return n_p, TM, TK


class PreparedAdjacency(NamedTuple):
    """Pre-stacked, zero-padded, bf16 adjacency + its tile plan (build once)."""
    data: jax.Array          # (S, n_p, n_p) bf16
    num_nodes: int
    tile_m: int
    tile_k: int


def prepare_adjacency(adjacency, *, tm=512, tk=1024):
    """adjacency: [S, N, N] (dense).  Pads + casts to bf16 ONCE; cache the result."""
    adjacency = jnp.asarray(adjacency)
    S, N, N2 = adjacency.shape
    assert N == N2
    n_p, TM, TK = _plan_tiles(N, tm, tk)
    a_p = jnp.pad(adjacency.astype(jnp.bfloat16),
                  ((0, 0), (0, n_p - N), (0, n_p - N)))
    return PreparedAdjacency(a_p, N, TM, TK)


# ----------------------------- Pallas kernel --------------------------------

def _gcn_kernel(a_ref, h_ref, o_ref, *, tk, activation, h_resident):
    """Each grid step (i, s, k):
         o[i] += A[s, i*TM:(i+1)*TM, k*TK:(k+1)*TK] @ H[s, k*TK:(k+1)*TK, :]
       accumulating in f32 directly in the resident output block; activation is
       applied on the final (s, k) step."""
    s = pl.program_id(1)
    k = pl.program_id(2)
    ns = pl.num_programs(1)
    nk = pl.num_programs(2)

    @pl.when((s == 0) & (k == 0))
    def _():
        o_ref[...] = jnp.zeros_like(o_ref)

    if h_resident:
        # Full H stack resident in VMEM; slice the (TK, D_out) tile for (s, k).
        row0 = pl.multiple_of(k * tk, tk)
        h_tile = h_ref[s, pl.ds(row0, tk), :]          # (TK, D_out) bf16
    else:
        h_tile = h_ref[...]                            # streamed (TK, D_out) bf16

    # (TM, TK) @ (TK, D_out) -> (TM, D_out), f32 MXU accumulation.
    o_ref[...] += jnp.dot(a_ref[...], h_tile, preferred_element_type=jnp.float32)

    @pl.when((s == ns - 1) & (k == nk - 1))
    def _():
        out = o_ref[...]
        if activation == "sigmoid":
            out = jax.nn.sigmoid(out)
        elif activation == "tanh":
            out = jnp.tanh(out)
        # 'linear' -> identity
        o_ref[...] = out


def gcn_pallas(features, adjacency, w_eff, *, activation="linear",
               tm=512, tk=1024, h_resident=None, vmem_limit_bytes=None):
    """features: [N, D_in] f32; adjacency: [S, N, N] f32 or PreparedAdjacency;
    w_eff: [S, D_in, D_out] f32.  Returns [N, D_out] f32.

    tm/tk tile the node dimension of the streamed A tiles.  Defaults (512x1024
    bf16 = 1 MiB per tile, double-buffered) keep the kernel HBM-bound on every
    generation; on v7x (3.2 TB/s HBM, 64 MiB VMEM) prefer tm=1024, tk=2048.
    """
    assert activation in ("linear", "sigmoid", "tanh")
    if not isinstance(adjacency, PreparedAdjacency):
        adjacency = prepare_adjacency(adjacency, tm=tm, tk=tk)

    a_p = adjacency.data
    N = adjacency.num_nodes
    TM, TK = adjacency.tile_m, adjacency.tile_k
    S, n_p, _ = a_p.shape
    nm, nk = n_p // TM, n_p // TK

    D_in = features.shape[1]
    assert features.shape[0] == N
    assert w_eff.shape[0] == S and w_eff.shape[1] == D_in
    D_out = w_eff.shape[-1]
    d_out_p = _round_up(D_out, 128)

    # --- hoisted support projection: H[s] = X @ W_eff[s] (computed once, f32) ---
    h = jnp.einsum("nd,sde->sne", features.astype(jnp.float32),
                   w_eff.astype(jnp.float32))
    h_p = jnp.pad(h.astype(jnp.bfloat16),
                  ((0, 0), (0, n_p - N), (0, d_out_p - D_out)))

    # --- generation-aware VMEM budget / H residency -----------------------------
    if vmem_limit_bytes is None:
        vmem_limit_bytes = _default_vmem_limit_bytes()
    a_buf_bytes = 2 * TM * TK * 2                 # double-buffered bf16 A tiles
    out_buf_bytes = 2 * TM * d_out_p * 4          # f32 accumulator tile
    h_resident_bytes = 2 * S * n_p * d_out_p * 2  # worst case: double-buffered
    if h_resident is None:
        h_resident = (a_buf_bytes + out_buf_bytes + h_resident_bytes
                      + 4 * _MiB) <= vmem_limit_bytes

    if h_resident:
        # Constant block index -> fetched once, zero extra HBM traffic.
        h_spec = pl.BlockSpec((S, n_p, d_out_p), lambda i, s, k: (0, 0, 0))
    else:
        # Streamed per (s, k); extra HBM traffic ~= d_out_p/TM of the A stream.
        h_spec = pl.BlockSpec((pl.Squeezed(), TK, d_out_p),
                              lambda i, s, k: (s, k, 0))

    kernel = functools.partial(_gcn_kernel, tk=TK, activation=activation,
                               h_resident=h_resident)

    flops = 2 * S * n_p * n_p * d_out_p
    transcendentals = n_p * d_out_p if activation != "linear" else 0
    h_bytes = 2 * S * n_p * d_out_p * (1 if h_resident else nm)
    bytes_accessed = 2 * S * n_p * n_p + h_bytes + 4 * n_p * d_out_p

    out_p = pl.pallas_call(
        kernel,
        out_shape=jax.ShapeDtypeStruct((n_p, d_out_p), jnp.float32),
        grid_spec=pltpu.PrefetchScalarGridSpec(
            num_scalar_prefetch=0,
            grid=(nm, S, nk),
            in_specs=[
                # A: streamed (TM, TK) tiles of relation s (auto double-buffered).
                pl.BlockSpec((pl.Squeezed(), TM, TK), lambda i, s, k: (s, i, k)),
                # H: resident or streamed (see above).
                h_spec,
            ],
            # Output row-tile doubles as the f32 accumulator across (s, k).
            out_specs=pl.BlockSpec((TM, d_out_p), lambda i, s, k: (i, 0)),
        ),
        compiler_params=pltpu.CompilerParams(
            dimension_semantics=("parallel", "arbitrary", "arbitrary"),
            vmem_limit_bytes=vmem_limit_bytes,
        ),
        cost_estimate=pl.CostEstimate(
            flops=flops, transcendentals=transcendentals,
            bytes_accessed=bytes_accessed),
    )(a_p, h_p)

    return out_p[:N, :D_out]


# --------------------------- Module-equivalent glue --------------------------

def xavier_uniform(key, shape):
    fan_in, fan_out = shape[-2], shape[-1]
    bound = math.sqrt(6.0 / (fan_in + fan_out))
    return jax.random.uniform(key, shape, jnp.float32, -bound, bound)


class GraphConvolutionPallas:
    """Mirrors the PyTorch GraphConvolution forward semantics."""

    def __init__(self, input_dim, output_dim, support=1, activation="linear",
                 num_bases=-1, bias=False, *, key, tm=512, tk=1024,
                 h_resident: Optional[bool] = None):
        assert support >= 1
        assert activation in ("linear", "sigmoid", "tanh")
        self.input_dim = input_dim
        self.output_dim = output_dim
        self.support = support
        self.activation = activation
        self.num_bases = num_bases
        self.bias = bias
        self.tm, self.tk, self.h_resident = tm, tk, h_resident
        self._adj_prepared: Optional[PreparedAdjacency] = None  # built once

        n_w = num_bases if num_bases > 0 else support
        keys = jax.random.split(key, n_w + 1)
        # stacked weight matrices, each [input_dim, output_dim]
        self.W = jnp.stack(
            [xavier_uniform(keys[i], (input_dim, output_dim)) for i in range(n_w)],
            axis=0,
        )
        self.W_comp = xavier_uniform(keys[-1], (support, num_bases)) if num_bases > 0 else None
        # TODO(synk): the PyTorch bias path adds a [output_dim, 1] tensor to a
        # [N, output_dim] output (only broadcasts when N == output_dim); bias=False only.
        if bias:
            raise NotImplementedError("bias path not supported (see TODO above)")

    def effective_weights(self):
        """[support, input_dim, output_dim] parameter composition (plain-JAX glue)."""
        if self.num_bases > 0:
            return jnp.einsum("ij,jab->iab", self.W_comp, self.W)
        return self.W

    def __call__(self, inputs):
        features = inputs[0]                  # [N, input_dim]
        # Graph structure is assumed fixed across calls (standard GCN usage):
        # pad/cast/stack the adjacency once and reuse the bf16 copy.
        if self._adj_prepared is None:
            A = jnp.stack(inputs[1:], axis=0)  # [support, N, N]
            self._adj_prepared = prepare_adjacency(A, tm=self.tm, tk=self.tk)
        return gcn_pallas(features, self._adj_prepared, self.effective_weights(),
                          activation=self.activation, tm=self.tm, tk=self.tk,
                          h_resident=self.h_resident)


# Pure-JAX reference (same math path as the PyTorch module) with the kernel's
# mixed precision (bf16 A/H operands, f32 accumulation).
def gcn_reference(features, A_list, W, W_comp, activation):
    V = jnp.einsum("ij,jab->iab", W_comp, W) if W_comp is not None else W
    H = jnp.einsum("nd,sde->sne", features.astype(jnp.float32),
                   V.astype(jnp.float32)).astype(jnp.bfloat16)
    out = jnp.zeros((features.shape[0], V.shape[-1]), jnp.float32)
    for i, A in enumerate(A_list):
        out = out + jnp.dot(A.astype(jnp.bfloat16), H[i],
                            preferred_element_type=jnp.float32)
    if activation == "sigmoid":
        out = jax.nn.sigmoid(out)
    elif activation == "tanh":
        out = jnp.tanh(out)
    return out


if __name__ == "__main__":
    root = jax.random.PRNGKey(0)
    k_feat, k_adj, k_mod, k_feat2, k_adj2, k_mod2 = jax.random.split(root, 6)

    # --- Test 1: small graph, num_bases > 0, tanh (module path, resident H) ---
    N, input_dim, output_dim, support, num_bases = 64, 32, 32, 2, 3
    features = jax.random.normal(k_feat, (N, input_dim), jnp.float32)
    adj_keys = jax.random.split(k_adj, support)
    A_list = [jax.random.uniform(adj_keys[i], (N, N), jnp.float32)
              for i in range(support)]

    layer = GraphConvolutionPallas(input_dim, output_dim, support=support,
                                   activation="tanh", num_bases=num_bases,
                                   bias=False, key=k_mod)
    out = jax.block_until_ready(layer([features] + A_list))
    assert out.shape == (N, output_dim)
    ref = gcn_reference(features, A_list, layer.W, layer.W_comp, "tanh")
    assert jnp.allclose(out, ref, atol=2e-2, rtol=2e-2), "mismatch (bases/tanh)"
    # Second call reuses the cached bf16 adjacency.
    out_b = jax.block_until_ready(layer([features] + A_list))
    assert jnp.allclose(out_b, out), "cached-adjacency call mismatch"

    # --- Test 2: num_bases <= 0 path, linear activation -----------------------
    layer2 = GraphConvolutionPallas(input_dim, output_dim, support=support,
                                    activation="linear", num_bases=-1,
                                    bias=False, key=k_mod)
    out2 = jax.block_until_ready(layer2([features] + A_list))
    ref2 = gcn_reference(features, A_list, layer2.W, None, "linear")
    assert jnp.allclose(out2, ref2, atol=2e-2, rtol=2e-2), "mismatch (linear)"

    # --- Test 3: ragged dims, multi-tile grid, forced STREAMED H, sigmoid -----
    N3, d_in3, d_out3, support3 = 320, 40, 72, 2
    feat3 = jax.random.normal(k_feat2, (N3, d_in3), jnp.float32)
    adj_keys3 = jax.random.split(k_adj2, support3)
    A3 = [jax.random.uniform(adj_keys3[i], (N3, N3), jnp.float32)
          for i in range(support3)]
    wkeys = jax.random.split(k_mod2, support3)
    W3 = jnp.stack([xavier_uniform(wkeys[i], (d_in3, d_out3))
                    for i in range(support3)], axis=0)
    out3 = jax.block_until_ready(
        gcn_pallas(feat3, jnp.stack(A3, axis=0), W3, activation="sigmoid",
                   tm=256, tk=256, h_resident=False))
    ref3 = gcn_reference(feat3, A3, W3, None, "sigmoid")
    assert out3.shape == (N3, d_out3)
    assert jnp.allclose(out3, ref3, atol=2e-2, rtol=2e-2), "mismatch (streamed H)"

    print("KERNEL_OK")
</pallas_src>

<mosaic_0001>
module attributes {stable_mosaic.version = 11 : i64} {
  func.func @_gcn_kernel(%arg0: i32, %arg1: i32, %arg2: i32, %arg3: memref<1x128x128xbf16, #tpu.memory_space<vmem>>, %arg4: memref<2x128x128xbf16, #tpu.memory_space<vmem>>, %arg5: memref<128x128xf32, #tpu.memory_space<vmem>>) attributes {dimension_semantics = [#tpu.dimension_semantics<parallel>, #tpu.dimension_semantics<arbitrary>, #tpu.dimension_semantics<arbitrary>], iteration_bounds = array<i64: 1, 2, 1>, scalar_prefetch = 0 : i64, scratch_operands = 0 : i64, tpu.core_type = #tpu.core_type<tc>, window_params = [{transform_indices = @transform_0, window_bounds = array<i64: 1, 128, 128>}, {pipeline_mode = #tpu.pipeline_mode<synchronous>, transform_indices = @transform_1, window_bounds = array<i64: 2, 128, 128>}, {transform_indices = @transform_2, window_bounds = array<i64: 128, 128>}]} {
    %c0_i32 = arith.constant 0 : i32
    %0 = arith.cmpi eq, %arg1, %c0_i32 : i32
    %c0_i32_0 = arith.constant 0 : i32
    %1 = arith.cmpi eq, %arg2, %c0_i32_0 : i32
    %2 = arith.andi %0, %1 : i1
    %3 = arith.extui %2 : i1 to i32
    %c0_i32_1 = arith.constant 0 : i32
    %4 = arith.cmpi ne, %3, %c0_i32_1 : i32
    scf.if %4 {
      %cst_11 = arith.constant 0.000000e+00 : f32
      %22 = vector.broadcast %cst_11 : f32 to vector<128x128xf32>
      %c0_12 = arith.constant 0 : index
      %c0_13 = arith.constant 0 : index
      %23 = vector.load %arg5[%c0_12, %c0_13] : memref<128x128xf32, #tpu.memory_space<vmem>>, vector<128x128xf32>
      tpu.vector_store %arg5[%c0_12, %c0_13], %22 {strides = array<i32>} : memref<128x128xf32, #tpu.memory_space<vmem>>, vector<128x128xf32>,
    } else {
    }
    %c128_i32 = arith.constant 128 : i32
    %5 = arith.muli %arg2, %c128_i32 : i32
    %6 = tpu.assume_multiple %5, 128 : i32
    %7 = arith.index_cast %arg1 : i32 to index
    %8 = arith.index_cast %6 : i32 to index
    %c0 = arith.constant 0 : index
    %9 = vector.load %arg4[%7, %8, %c0] : memref<2x128x128xbf16, #tpu.memory_space<vmem>>, vector<1x128x128xbf16>
    %10 = vector.shape_cast %9 : vector<1x128x128xbf16> to vector<128x128xbf16>
    %c0_2 = arith.constant 0 : index
    %c0_3 = arith.constant 0 : index
    %11 = vector.load %arg5[%c0_2, %c0_3] : memref<128x128xf32, #tpu.memory_space<vmem>>, vector<128x128xf32>
    %c0_4 = arith.constant 0 : index
    %c0_5 = arith.constant 0 : index
    %c0_6 = arith.constant 0 : index
    %12 = vector.load %arg3[%c0_4, %c0_5, %c0_6] : memref<1x128x128xbf16, #tpu.memory_space<vmem>>, vector<1x128x128xbf16>
    %13 = vector.shape_cast %12 : vector<1x128x128xbf16> to vector<128x128xbf16>
    %cst = arith.constant dense<0.000000e+00> : vector<128x128xf32>
    %14 = tpu.matmul %13, %10, %cst {dimension_numbers = #tpu.dot_dimension_numbers<[1], [0], [0], [1], [0, 0, 1, 1], [], []>} : vector<128x128xbf16>, vector<128x128xbf16>, vector<128x128xf32> -> vector<128x128xf32>
    %15 = arith.addf %11, %14 : vector<128x128xf32>
    %c0_7 = arith.constant 0 : index
    %c0_8 = arith.constant 0 : index
    %16 = vector.load %arg5[%c0_7, %c0_8] : memref<128x128xf32, #tpu.memory_space<vmem>>, vector<128x128xf32>
    tpu.vector_store %arg5[%c0_7, %c0_8], %15 {strides = array<i32>} : memref<128x128xf32, #tpu.memory_space<vmem>>, vector<128x128xf32>,
    %c1_i32 = arith.constant 1 : i32
    %17 = arith.cmpi eq, %arg1, %c1_i32 : i32
    %c0_i32_9 = arith.constant 0 : i32
    %18 = arith.cmpi eq, %arg2, %c0_i32_9 : i32
    %19 = arith.andi %17, %18 : i1
    %20 = arith.extui %19 : i1 to i32
    %c0_i32_10 = arith.constant 0 : i32
    %21 = arith.cmpi ne, %20, %c0_i32_10 : i32
    scf.if %21 {
      %c0_11 = arith.constant 0 : index
      %c0_12 = arith.constant 0 : index
      %22 = vector.load %arg5[%c0_11, %c0_12] : memref<128x128xf32, #tpu.memory_space<vmem>>, vector<128x128xf32>
      %23 = math.tanh %22 : vector<128x128xf32>
      %c0_13 = arith.constant 0 : index
      %c0_14 = arith.constant 0 : index
      %24 = vector.load %arg5[%c0_13, %c0_14] : memref<128x128xf32, #tpu.memory_space<vmem>>, vector<128x128xf32>
      tpu.vector_store %arg5[%c0_13, %c0_14], %23 {strides = array<i32>} : memref<128x128xf32, #tpu.memory_space<vmem>>, vector<128x128xf32>,
    } else {
    }
    return
  }
  func.func @transform_0(%arg0: i32, %arg1: i32, %arg2: i32) -> (i32, i32, i32) {
    %c0_i32 = arith.constant 0 : i32
    return %arg1, %arg0, %arg2 : i32, i32, i32
  }
  func.func @transform_1(%arg0: i32, %arg1: i32, %arg2: i32) -> (i32, i32, i32) {
    %c0_i32 = arith.constant 0 : i32
    %c0_i32_0 = arith.constant 0 : i32
    %c0_i32_1 = arith.constant 0 : i32
    %c0_i32_2 = arith.constant 0 : i32
    return %c0_i32, %c0_i32_0, %c0_i32_1 : i32, i32, i32
  }
  func.func @transform_2(%arg0: i32, %arg1: i32, %arg2: i32) -> (i32, i32) {
    %c0_i32 = arith.constant 0 : i32
    %c0_i32_0 = arith.constant 0 : i32
    return %arg0, %c0_i32 : i32, i32
  }
}

</mosaic_0001>

<llo_original>
// kernel: tpu_custom_call.1
$region0: #{tpu_custom_call.1}
  #allocation0 [shape = 'u32[]', space=smem, size = 0x4, offset = 0x4, fixed_abs, tag = 'smem constant byte address 0x4 - core index']
  #allocation1 [shape = 'u32[72,128]{1,0:T(1,128)}', space=vmem, size = 0x9000, scoped, tag = 'internal scratch']
  %s0 = inlined_call_operand.hbm [shape: bf16[2,128,128], index: 0, kind: input, shape index: {}]
  %s1 = inlined_call_operand.hbm [shape: bf16[2,128,128], index: 1, kind: input, shape index: {}]
  %s2 = inlined_call_operand.hbm [shape: f32[128,128], index: 2, kind: output, shape index: {}]
  %s3 = sld [smem:[#allocation0]]
  $region57: #{tpu_custom_call.1} parent=0
    _
  %s5 = ssub.s32 1, %s3
  %s6 = scalar_select 0, %s5, %s3
  $region1: #{tpu_custom_call.1} parent=0
    #allocation2 [shape = 'u8[65536]{0}', space=vmem, size = 0x10000, scoped, tag = 'input window, operand 0']
    #allocation3 [shape = 's32[2]{0}', space=sflag, size = 0x8, scoped, tag = 'scoped memory for tpu_custom_call.1']
    #allocation4 [shape = 's32[2]{0}', space=sflag, size = 0x8, scoped, tag = 'scoped memory for tpu_custom_call.1']
    #allocation5 [shape = 'u8[65536]{0}', space=vmem, size = 0x10000, scoped, tag = 'input window, operand 1, single buffered']
    #allocation6 [shape = 's32[1]{0}', space=sflag, size = 0x4, scoped, tag = 'scoped memory for tpu_custom_call.1']
    #allocation7 [shape = 'u8[65536]{0}', space=vmem, size = 0x10000, scoped, tag = 'output window, operand 0, single buffered']
    %7 = vsyncpa [#allocation3], 0
    %s8 = scalar_lea.sflag [#allocation3], 1
    %9 = vsyncpa %s8, 0
    %10 = vsyncpa [#allocation6], 0
    %11 = vsyncpa [#allocation4], 0
    loop: start=0, step=1, limit=4
    $region2: #{tpu_custom_call.1} parent=1 // loop_pre_header
      _
    $region3: #{tpu_custom_call.1} parent=1 // loop_header
      %s13 = sphi 0, %s17
      %p14 = scmp.ge.s32.totalorder %s13, 4
      %s20 = sphi 0, %s39
      %s21 = sphi 0, %s35
      %s22 = sphi 0, %s31
      %s23 = sphi 0, %s20
      %s24 = sphi 0, %s21
      %s25 = sphi 0, %s22
      %s26 = sphi 0, %s23
      %s27 = sphi 0, %s24
      %s28 = sphi 0, %s25
      %s46 = sphi 0, %s48
      %s49 = sphi 0, %s46
      %s50 = sphi 0, %s49
      %s66 = sphi 0, %s50
      %s70 = sphi 0, %s70
      %s72 = sphi 0, %s70
      %s73 = sphi 0, %s72
      %s87 = sphi 0, %s73
      %s93 = sphi 0, %s95
      %s96 = sphi 0, %s93
      %s97 = sphi 0, %s96
      %s113 = sphi 0, %s97
    $region4: #{tpu_custom_call.1} parent=1 // loop_header_branch
      %16 = sbr.rel (%p14) target = $region8
    $region5: #{tpu_custom_call.1} parent=1 // loop_body
      %s18 = ssub.s32 %s13, 1
      %s19 = ssub.s32 %s13, 2
      %s29 = sadd.s32 1, %s22
      %p30 = scmp.ge.s32.totalorder %s29, 1
      %s31 = scalar_select %p30, 0, %s29
      %s32 = sadd.s32 1, %s21
      %s33 = scalar_select %p30, %s32, %s21
      %p34 = scmp.ge.s32.totalorder %s33, 2
      %s35 = scalar_select %p34, 0, %s33
      %s36 = sadd.s32 1, %s20
      %s37 = scalar_select %p34, %s36, %s20
      %p38 = scmp.ge.s32.totalorder %s37, 1
      %s39 = scalar_select %p38, 0, %s37
      %s40 = ssub.s32 %s21, %s35
      %s41 = ssub.s32 %s20, %s39
      %s42 = sor.u32 %s40, %s41
      %s43 = ssub.s32 %s22, %s31
      %s44 = sor.u32 %s42, %s43
      %p45 = scmp.eq.s32.totalorder %s44, 0
      %s47 = sadd.s32 %s46, 1
      %s48 = scalar_select %p45, %s46, %s47
      %p51 = pneg %p45
      %p52 = scmp.eq.s32.totalorder %s13, 1
      %p53 = por %p51, %p52
      %p54 = scmp.ne.s32.totalorder %s46, %s49
      %p55 = scmp.eq.s32.totalorder %s13, 0
      %p56 = por %p54, %p55
      %p57 = scmp.ne.s32.totalorder %s46, %s49
      %p58 = scmp.eq.s32.totalorder %s18, 1
      %p59 = por %p57, %p58
      %p60 = scmp.ne.s32.totalorder %s49, %s50
      %p61 = scmp.eq.s32.totalorder %s18, 0
      %p62 = por %p60, %p61
      %p63 = scmp.ne.s32.totalorder %s49, %s50
      %p64 = scmp.eq.s32.totalorder %s19, 1
      %p65 = por %p63, %p64
      %p67 = scmp.ne.s32.totalorder %s50, %s66
      %p68 = scmp.eq.s32.totalorder %s19, 0
      %p69 = por %p67, %p68
      %s71 = sadd.s32 %s70, 1
      %p74 = scmp.eq.s32.totalorder %s13, 1
      %p75 = scmp.ne.s32.totalorder %s70, %s72
      %p76 = scmp.eq.s32.totalorder %s13, 0
      %p77 = por %p75, %p76
      %p78 = scmp.ne.s32.totalorder %s70, %s72
      %p79 = scmp.eq.s32.totalorder %s18, 1
      %p80 = por %p78, %p79
      %p81 = scmp.ne.s32.totalorder %s72, %s73
      %p82 = scmp.eq.s32.totalorder %s18, 0
      %p83 = por %p81, %p82
      %p84 = scmp.ne.s32.totalorder %s72, %s73
      %p85 = scmp.eq.s32.totalorder %s19, 1
      %p86 = por %p84, %p85
      %p88 = scmp.ne.s32.totalorder %s73, %s87
      %p89 = scmp.eq.s32.totalorder %s19, 0
      %p90 = por %p88, %p89
      %s91 = ssub.s32 %s20, %s39
      %p92 = scmp.eq.s32.totalorder %s91, 0
      %s94 = sadd.s32 %s93, 1
      %s95 = scalar_select %p92, %s93, %s94
      %p98 = pneg %p92
      %p99 = scmp.eq.s32.totalorder %s13, 1
      %p100 = por %p98, %p99
      %p101 = scmp.ne.s32.totalorder %s93, %s96
      %p102 = scmp.eq.s32.totalorder %s13, 0
      %p103 = por %p101, %p102
      %p104 = scmp.ne.s32.totalorder %s93, %s96
      %p105 = scmp.eq.s32.totalorder %s18, 1
      %p106 = por %p104, %p105
      %p107 = scmp.ne.s32.totalorder %s96, %s97
      %p108 = scmp.eq.s32.totalorder %s18, 0
      %p109 = por %p107, %p108
      %p110 = scmp.ne.s32.totalorder %s96, %s97
      %p111 = scmp.eq.s32.totalorder %s19, 1
      %p112 = por %p110, %p111
      %p114 = scmp.ne.s32.totalorder %s97, %s113
      %p115 = scmp.eq.s32.totalorder %s19, 0
      %p116 = por %p114, %p115
      %p117 = scmp.le.s32.totalorder 1, %s13
      %p118 = scmp.lt.s32.totalorder %s13, 3
      %p119 = pnand %p117, %p118
      %p120 = pneg %p119
      // Predicated region
      $region9: #{tpu_custom_call.1} parent=5 // pred_check
        _
      $region10: #{tpu_custom_call.1} parent=5 // pred_check_branch
        %122 = sbr.rel (%p119) target = $region12
      $region11: #{tpu_custom_call.1} parent=5 // pred_region
        %s123 = ssub.s32 %s13, 1
        // Predicated region
        $region13: #{tpu_custom_call.1} parent=11 // pred_check
          %p124 = pneg %p83
        $region14: #{tpu_custom_call.1} parent=11 // pred_check_branch
          %126 = sbr.rel (%p124) target = $region16
        $region15: #{tpu_custom_call.1} parent=11 // pred_region
          %128 = vsyncadd [#allocation6], 0
          %s129 = sshll.u32 %s1, 4
          %s130 = int_to_ptr.hbm [resolvable:$true] %s129
          %s131 = sshll.u32 [#allocation5], 4
          %s132 = int_to_ptr.vmem [resolvable:$true] %s131
          %137 = dma.hbm_to_vmem [thread:$0]  %s130, 2048, %s132, [#allocation6], 64, 64, 4
        $region16: #{tpu_custom_call.1} parent=11 // pred_fallthru
          _
      $region12: #{tpu_custom_call.1} parent=5 // pred_fallthru
        _
      %p138 = scmp.lt.s32.totalorder %s13, 2
      // Predicated region
      $region17: #{tpu_custom_call.1} parent=5 // pred_check
        %p139 = pneg %p138
      $region18: #{tpu_custom_call.1} parent=5 // pred_check_branch
        %141 = sbr.rel (%p139) target = $region20
      $region19: #{tpu_custom_call.1} parent=5 // pred_region
        // Predicated region
        $region21: #{tpu_custom_call.1} parent=19 // pred_check
          %p142 = pneg %p56
        $region22: #{tpu_custom_call.1} parent=19 // pred_check_branch
          %144 = sbr.rel (%p142) target = $region24
        $region23: #{tpu_custom_call.1} parent=19 // pred_region
          %s145 = sand.u32 %s46, 1
          %s146 = scalar_lea.sflag [#allocation3], %s145
          %s147 = sand.u32 %s46, 1
          %s148 = smul.addr %s147, 64
          %s149 = scalar_lea.vmem [#allocation2], %s148
          %s150 = smul.u32 16, %s20
          %152 = vsyncadd %s146, 0
          %s153 = sadd.s32 %s22, %s150
          %s154 = smul.addr %s21, 16
          %s155 = sadd.s32 %s153, %s154
          %s156 = smul.addr %s155, 4
          %s157 = scalar_lea.hbm %s0, %s156
          %s158 = sshll.u32 %s157, 4
          %s159 = int_to_ptr.hbm [resolvable:$true] %s158
          %s160 = sshll.u32 %s149, 4
          %s161 = int_to_ptr.vmem [resolvable:$true] %s160
          %166 = dma.hbm_to_vmem [thread:$0]  %s159, 1024, %s161, %s146, 64, 64, 4
        $region24: #{tpu_custom_call.1} parent=19 // pred_fallthru
          _
      $region20: #{tpu_custom_call.1} parent=5 // pred_fallthru
        _
      %p167 = scmp.le.s32.totalorder 1, %s13
      %p168 = scmp.lt.s32.totalorder %s13, 3
      %p169 = pnand %p167, %p168
      %p170 = pneg %p169
      // Predicated region
      $region25: #{tpu_custom_call.1} parent=5 // pred_check
        _
      $region26: #{tpu_custom_call.1} parent=5 // pred_check_branch
        %172 = sbr.rel (%p169) target = $region28
      $region27: #{tpu_custom_call.1} parent=5 // pred_region
        %s173 = ssub.s32 %s13, 1
        %s174 = sand.u32 %s49, 1
        %s175 = scalar_lea.sflag [#allocation3], %s174
        %s176 = sand.u32 %s49, 1
        %s177 = smul.addr %s176, 64
        %s178 = scalar_lea.vmem [#allocation2], %s177
        // Predicated region
        $region29: #{tpu_custom_call.1} parent=27 // pred_check
          %p179 = pneg %p62
        $region30: #{tpu_custom_call.1} parent=27 // pred_check_branch
          %181 = sbr.rel (%p179) target = $region32
        $region31: #{tpu_custom_call.1} parent=27 // pred_region
          %183 = dma.done %s175, 1024
        $region32: #{tpu_custom_call.1} parent=27 // pred_fallthru
          _
        // Predicated region
        $region33: #{tpu_custom_call.1} parent=27 // pred_check
          %p184 = pneg %p83
        $region34: #{tpu_custom_call.1} parent=27 // pred_check_branch
          %186 = sbr.rel (%p184) target = $region36
        $region35: #{tpu_custom_call.1} parent=27 // pred_region
          %188 = dma.done [#allocation6], 2048
        $region36: #{tpu_custom_call.1} parent=27 // pred_fallthru
          _
        %s189 = sand.u32 %s49, 1
        %s190 = scalar_lea.sflag [#allocation3], %s189
        %s191 = sand.u32 %s49, 1
        %s192 = smul.addr %s191, 64
        %s193 = scalar_lea.vmem [#allocation2], %s192
        %p194 = pneg %p62
        %p195 = pneg %p59
        %p196 = pneg %p83
        %p197 = pneg %p80
        %p198 = pneg %p109
        %p199 = pneg %p106
        %s200 = smul.u32 16, %s23
        %s201 = smul.u32 16, %s23
        %p202 = scmp.eq.s32.totalorder %s24, 0
        %p203 = scmp.eq.s32.totalorder %s25, 0
        %p204 = pnand %p202, %p203
        %p205 = pneg %p204
        // Predicated region
        $region37: #{tpu_custom_call.1} parent=27 // pred_check
          _
        $region38: #{tpu_custom_call.1} parent=27 // pred_check_branch
          %207 = sbr.rel (%p204) target = $region40
        $region39: #{tpu_custom_call.1} parent=27 // pred_region
          %208 = vst [vmem:[#allocation7] sm:$0xff] 0.0
          %209 = vst [vmem:[#allocation7 + $0x8] sm:$0xff] 0.0
          %210 = vst [vmem:[#allocation7 + $0x10] sm:$0xff] 0.0
          %211 = vst [vmem:[#allocation7 + $0x18] sm:$0xff] 0.0
          %212 = vst [vmem:[#allocation7 + $0x20] sm:$0xff] 0.0
          %213 = vst [vmem:[#allocation7 + $0x28] sm:$0xff] 0.0
          %214 = vst [vmem:[#allocation7 + $0x30] sm:$0xff] 0.0
          %215 = vst [vmem:[#allocation7 + $0x38] sm:$0xff] 0.0
          %216 = vst [vmem:[#allocation7 + $0x40] sm:$0xff] 0.0
          %217 = vst [vmem:[#allocation7 + $0x48] sm:$0xff] 0.0
          %218 = vst [vmem:[#allocation7 + $0x50] sm:$0xff] 0.0
          %219 = vst [vmem:[#allocation7 + $0x58] sm:$0xff] 0.0
          %220 = vst [vmem:[#allocation7 + $0x60] sm:$0xff] 0.0
          %221 = vst [vmem:[#allocation7 + $0x68] sm:$0xff] 0.0
          %222 = vst [vmem:[#allocation7 + $0x70] sm:$0xff] 0.0
          %223 = vst [vmem:[#allocation7 + $0x78] sm:$0xff] 0.0
        $region40: #{tpu_custom_call.1} parent=27 // pred_fallthru
          _
        %s224 = smul.u32 %s25, 128
        %s225 = sshra.s32 %s224, 3
        %s226 = sand.u32 %s224, 7
        %s227 = smul.u32 %s24, 16
        %s228 = sadd.s32 %s225, %s227
        %s229 = smul.addr %s228, 4
        %s230 = scalar_lea.vmem [#allocation5], %s229
        %v231 = vld [vmem:[%s230] sm:$0xf]
        %v232 = vld [vmem:[%s230 + $0x4] sm:$0xf]
        %v233 = vld [vmem:[%s230 + $0x8] sm:$0xf]
        %v234 = vld [vmem:[%s230 + $0xc] sm:$0xf]
        %v235 = vld [vmem:[%s230 + $0x10] sm:$0xf]
        %v236 = vld [vmem:[%s230 + $0x14] sm:$0xf]
        %v237 = vld [vmem:[%s230 + $0x18] sm:$0xf]
        %v238 = vld [vmem:[%s230 + $0x1c] sm:$0xf]
        %v239 = vld [vmem:[%s230 + $0x20] sm:$0xf]
        %v240 = vld [vmem:[%s230 + $0x24] sm:$0xf]
        %v241 = vld [vmem:[%s230 + $0x28] sm:$0xf]
        %v242 = vld [vmem:[%s230 + $0x2c] sm:$0xf]
        %v243 = vld [vmem:[%s230 + $0x30] sm:$0xf]
        %v244 = vld [vmem:[%s230 + $0x34] sm:$0xf]
        %v245 = vld [vmem:[%s230 + $0x38] sm:$0xf]
        %v246 = vld [vmem:[%s230 + $0x3c] sm:$0xf]
        %v247 = vld [vmem:[#allocation7] sm:$0xff]
        %v248 = vld [vmem:[#allocation7 + $0x8] sm:$0xff]
        %v249 = vld [vmem:[#allocation7 + $0x10] sm:$0xff]
        %v250 = vld [vmem:[#allocation7 + $0x18] sm:$0xff]
        %v251 = vld [vmem:[#allocation7 + $0x20] sm:$0xff]
        %v252 = vld [vmem:[#allocation7 + $0x28] sm:$0xff]
        %v253 = vld [vmem:[#allocation7 + $0x30] sm:$0xff]
        %v254 = vld [vmem:[#allocation7 + $0x38] sm:$0xff]
        %v255 = vld [vmem:[#allocation7 + $0x40] sm:$0xff]
        %v256 = vld [vmem:[#allocation7 + $0x48] sm:$0xff]
        %v257 = vld [vmem:[#allocation7 + $0x50] sm:$0xff]
        %v258 = vld [vmem:[#allocation7 + $0x58] sm:$0xff]
        %v259 = vld [vmem:[#allocation7 + $0x60] sm:$0xff]
        %v260 = vld [vmem:[#allocation7 + $0x68] sm:$0xff]
        %v261 = vld [vmem:[#allocation7 + $0x70] sm:$0xff]
        %v262 = vld [vmem:[#allocation7 + $0x78] sm:$0xff]
        %v263 = vld [vmem:[%s178] sm:$0xf]
        %v264 = vld [vmem:[%s178 + $0x4] sm:$0xf]
        %v265 = vld [vmem:[%s178 + $0x8] sm:$0xf]
        %v266 = vld [vmem:[%s178 + $0xc] sm:$0xf]
        %v267 = vld [vmem:[%s178 + $0x10] sm:$0xf]
        %v268 = vld [vmem:[%s178 + $0x14] sm:$0xf]
        %v269 = vld [vmem:[%s178 + $0x18] sm:$0xf]
        %v270 = vld [vmem:[%s178 + $0x1c] sm:$0xf]
        %v271 = vld [vmem:[%s178 + $0x20] sm:$0xf]
        %v272 = vld [vmem:[%s178 + $0x24] sm:$0xf]
        %v273 = vld [vmem:[%s178 + $0x28] sm:$0xf]
        %v274 = vld [vmem:[%s178 + $0x2c] sm:$0xf]
        %v275 = vld [vmem:[%s178 + $0x30] sm:$0xf]
        %v276 = vld [vmem:[%s178 + $0x34] sm:$0xf]
        %v277 = vld [vmem:[%s178 + $0x38] sm:$0xf]
        %v278 = vld [vmem:[%s178 + $0x3c] sm:$0xf]
        %v295 = vunpack.c.l.b16 %v263
        %v296 = vunpack.c.l.b16 %v264
        %v297 = vunpack.c.l.b16 %v265
        %v298 = vunpack.c.l.b16 %v266
        %v299 = vunpack.c.l.b16 %v267
        %v300 = vunpack.c.l.b16 %v268
        %v301 = vunpack.c.l.b16 %v269
        %v302 = vunpack.c.l.b16 %v270
        %v303 = vunpack.c.l.b16 %v271
        %v304 = vunpack.c.l.b16 %v272
        %v305 = vunpack.c.l.b16 %v273
        %v306 = vunpack.c.l.b16 %v274
        %v307 = vunpack.c.l.b16 %v275
        %v308 = vunpack.c.l.b16 %v276
        %v309 = vunpack.c.l.b16 %v277
        %v310 = vunpack.c.l.b16 %v278
        %v311 = vpack.c.b16 %v296, %v295
        %v312 = vpack.c.b16 %v298, %v297
        %v313 = vpack.c.b16 %v300, %v299
        %v314 = vpack.c.b16 %v302, %v301
        %v315 = vpack.c.b16 %v304, %v303
        %v316 = vpack.c.b16 %v306, %v305
        %v317 = vpack.c.b16 %v308, %v307
        %v318 = vpack.c.b16 %v310, %v309
        %v343 = vunpack.c.l.b16 %v231
        %v344 = vunpack.c.l.b16 %v232
        %v345 = vunpack.c.l.b16 %v233
        %v346 = vunpack.c.l.b16 %v234
        %v347 = vunpack.c.l.b16 %v235
        %v348 = vunpack.c.l.b16 %v236
        %v349 = vunpack.c.l.b16 %v237
        %v350 = vunpack.c.l.b16 %v238
        %v351 = vunpack.c.l.b16 %v239
        %v352 = vunpack.c.l.b16 %v240
        %v353 = vunpack.c.l.b16 %v241
        %v354 = vunpack.c.l.b16 %v242
        %v355 = vunpack.c.l.b16 %v243
        %v356 = vunpack.c.l.b16 %v244
        %v357 = vunpack.c.l.b16 %v245
        %v358 = vunpack.c.l.b16 %v246
        %v359 = vpack.c.b16 %v344, %v343
        %v360 = vpack.c.b16 %v346, %v345
        %v361 = vpack.c.b16 %v348, %v347
        %v362 = vpack.c.b16 %v350, %v349
        %v363 = vpack.c.b16 %v352, %v351
        %v364 = vpack.c.b16 %v354, %v353
        %v365 = vpack.c.b16 %v356, %v355
        %v366 = vpack.c.b16 %v358, %v357
        %375 = vmatpush.bf16.msra.mxu0 %v366
        %376 = vmatpush.bf16.msra.mxu0 %v365
        %377 = vmatpush.bf16.msra.mxu0 %v364
        %378 = vmatpush.bf16.msra.mxu0 %v363
        %379 = vmatpush.bf16.msra.mxu0 %v362
        %380 = vmatpush.bf16.msra.mxu0 %v361
        %381 = vmatpush.bf16.msra.mxu0 %v360
        %382 = vmatpush.bf16.msra.mxu0 %v359
        %383 = vmatmul.bf16.gmra.mxu0 %v311
        %v384 = vpop.f32.mrf.mxu0
        %v385 = vadd.f32 0.0, %v384
        %v386 = vpop.f32.mrf.mxu0
        %v387 = vadd.f32 0.0, %v386
        %388 = vmatmul.bf16.gmra.mxu0 %v312
        %v389 = vpop.f32.mrf.mxu0
        %v390 = vadd.f32 0.0, %v389
        %v391 = vpop.f32.mrf.mxu0
        %v392 = vadd.f32 0.0, %v391
        %393 = vmatmul.bf16.gmra.mxu0 %v313
        %v394 = vpop.f32.mrf.mxu0
        %v395 = vadd.f32 0.0, %v394
        %v396 = vpop.f32.mrf.mxu0
        %v397 = vadd.f32 0.0, %v396
        %398 = vmatmul.bf16.gmra.mxu0 %v314
        %v399 = vpop.f32.mrf.mxu0
        %v400 = vadd.f32 0.0, %v399
        %v401 = vpop.f32.mrf.mxu0
        %v402 = vadd.f32 0.0, %v401
        %403 = vmatmul.bf16.gmra.mxu0 %v315
        %v404 = vpop.f32.mrf.mxu0
        %v405 = vadd.f32 0.0, %v404
        %v406 = vpop.f32.mrf.mxu0
        %v407 = vadd.f32 0.0, %v406
        %408 = vmatmul.bf16.gmra.mxu0 %v316
        %v409 = vpop.f32.mrf.mxu0
        %v410 = vadd.f32 0.0, %v409
        %v411 = vpop.f32.mrf.mxu0
        %v412 = vadd.f32 0.0, %v411
        %413 = vmatmul.bf16.gmra.mxu0 %v317
        %v414 = vpop.f32.mrf.mxu0
        %v415 = vadd.f32 0.0, %v414
        %v416 = vpop.f32.mrf.mxu0
        %v417 = vadd.f32 0.0, %v416
        %418 = vmatmul.bf16.gmra.mxu0 %v318
        %v419 = vpop.f32.mrf.mxu0
        %v420 = vadd.f32 0.0, %v419
        %v421 = vpop.f32.mrf.mxu0
        %v422 = vadd.f32 0.0, %v421
        %423 = vdwg.mxu0
        %v424 = vadd.f32 %v247, %v385
        %v425 = vadd.f32 %v248, %v387
        %v426 = vadd.f32 %v249, %v390
        %v427 = vadd.f32 %v250, %v392
        %v428 = vadd.f32 %v251, %v395
        %v429 = vadd.f32 %v252, %v397
        %v430 = vadd.f32 %v253, %v400
        %v431 = vadd.f32 %v254, %v402
        %v432 = vadd.f32 %v255, %v405
        %v433 = vadd.f32 %v256, %v407
        %v434 = vadd.f32 %v257, %v410
        %v435 = vadd.f32 %v258, %v412
        %v436 = vadd.f32 %v259, %v415
        %v437 = vadd.f32 %v260, %v417
        %v438 = vadd.f32 %v261, %v420
        %v439 = vadd.f32 %v262, %v422
        %440 = vst [vmem:[#allocation7] sm:$0xff] %v424
        %441 = vst [vmem:[#allocation7 + $0x8] sm:$0xff] %v425
        %442 = vst [vmem:[#allocation7 + $0x10] sm:$0xff] %v426
        %443 = vst [vmem:[#allocation7 + $0x18] sm:$0xff] %v427
        %444 = vst [vmem:[#allocation7 + $0x20] sm:$0xff] %v428
        %445 = vst [vmem:[#allocation7 + $0x28] sm:$0xff] %v429
        %446 = vst [vmem:[#allocation7 + $0x30] sm:$0xff] %v430
        %447 = vst [vmem:[#allocation7 + $0x38] sm:$0xff] %v431
        %448 = vst [vmem:[#allocation7 + $0x40] sm:$0xff] %v432
        %449 = vst [vmem:[#allocation7 + $0x48] sm:$0xff] %v433
        %450 = vst [vmem:[#allocation7 + $0x50] sm:$0xff] %v434
        %451 = vst [vmem:[#allocation7 + $0x58] sm:$0xff] %v435
        %452 = vst [vmem:[#allocation7 + $0x60] sm:$0xff] %v436
        %453 = vst [vmem:[#allocation7 + $0x68] sm:$0xff] %v437
        %454 = vst [vmem:[#allocation7 + $0x70] sm:$0xff] %v438
        %455 = vst [vmem:[#allocation7 + $0x78] sm:$0xff] %v439
        %p456 = scmp.eq.s32.totalorder %s24, 1
        %p457 = pnand %p456, %p203
        %p458 = pneg %p457
        // Predicated region
        $region41: #{tpu_custom_call.1} parent=27 // pred_check
          _
        $region42: #{tpu_custom_call.1} parent=27 // pred_check_branch
          %460 = sbr.rel (%p457) target = $region44
        $region43: #{tpu_custom_call.1} parent=27 // pred_region
          %v461 = vld [vmem:[#allocation7] sm:$0xff]
          %v462 = vld [vmem:[#allocation7 + $0x8] sm:$0xff]
          %v463 = vld [vmem:[#allocation7 + $0x10] sm:$0xff]
          %v464 = vld [vmem:[#allocation7 + $0x18] sm:$0xff]
          %v465 = vld [vmem:[#allocation7 + $0x20] sm:$0xff]
          %v466 = vld [vmem:[#allocation7 + $0x28] sm:$0xff]
          %v467 = vld [vmem:[#allocation7 + $0x30] sm:$0xff]
          %v468 = vld [vmem:[#allocation7 + $0x38] sm:$0xff]
          %v469 = vld [vmem:[#allocation7 + $0x40] sm:$0xff]
          %v470 = vld [vmem:[#allocation7 + $0x48] sm:$0xff]
          %v471 = vld [vmem:[#allocation7 + $0x50] sm:$0xff]
          %v472 = vld [vmem:[#allocation7 + $0x58] sm:$0xff]
          %v473 = vld [vmem:[#allocation7 + $0x60] sm:$0xff]
          %v474 = vld [vmem:[#allocation7 + $0x68] sm:$0xff]
          %v475 = vld [vmem:[#allocation7 + $0x70] sm:$0xff]
          %v476 = vld [vmem:[#allocation7 + $0x78] sm:$0xff]
          %v477 = vtanh.pop %v461
          %v478 = vtanh.pop %v462
          %v479 = vtanh.pop %v463
          %v480 = vtanh.pop %v464
          %v481 = vtanh.pop %v465
          %v482 = vtanh.pop %v466
          %v483 = vtanh.pop %v467
          %v484 = vtanh.pop %v468
          %v485 = vtanh.pop %v469
          %v486 = vtanh.pop %v470
          %v487 = vtanh.pop %v471
          %v488 = vtanh.pop %v472
          %v489 = vtanh.pop %v473
          %v490 = vtanh.pop %v474
          %v491 = vtanh.pop %v475
          %v492 = vtanh.pop %v476
          %493 = vst [vmem:[#allocation7] sm:$0xff] %v477
          %494 = vst [vmem:[#allocation7 + $0x8] sm:$0xff] %v478
          %495 = vst [vmem:[#allocation7 + $0x10] sm:$0xff] %v479
          %496 = vst [vmem:[#allocation7 + $0x18] sm:$0xff] %v480
          %497 = vst [vmem:[#allocation7 + $0x20] sm:$0xff] %v481
          %498 = vst [vmem:[#allocation7 + $0x28] sm:$0xff] %v482
          %499 = vst [vmem:[#allocation7 + $0x30] sm:$0xff] %v483
          %500 = vst [vmem:[#allocation7 + $0x38] sm:$0xff] %v484
          %501 = vst [vmem:[#allocation7 + $0x40] sm:$0xff] %v485
          %502 = vst [vmem:[#allocation7 + $0x48] sm:$0xff] %v486
          %503 = vst [vmem:[#allocation7 + $0x50] sm:$0xff] %v487
          %504 = vst [vmem:[#allocation7 + $0x58] sm:$0xff] %v488
          %505 = vst [vmem:[#allocation7 + $0x60] sm:$0xff] %v489
          %506 = vst [vmem:[#allocation7 + $0x68] sm:$0xff] %v490
          %507 = vst [vmem:[#allocation7 + $0x70] sm:$0xff] %v491
          %508 = vst [vmem:[#allocation7 + $0x78] sm:$0xff] %v492
        $region44: #{tpu_custom_call.1} parent=27 // pred_fallthru
          _
        // Predicated region
        $region45: #{tpu_custom_call.1} parent=27 // pred_check
          %p509 = pneg %p106
        $region46: #{tpu_custom_call.1} parent=27 // pred_check_branch
          %511 = sbr.rel (%p509) target = $region48
        $region47: #{tpu_custom_call.1} parent=27 // pred_region
          %s512 = smul.u32 16, %s23
          %514 = vsyncadd [#allocation4], 0
          %s515 = smul.addr %s512, 8
          %s516 = scalar_lea.hbm %s2, %s515
          %s517 = sshll.u32 [#allocation7], 4
          %s518 = int_to_ptr.vmem [resolvable:$true] %s517
          %s519 = sshll.u32 %s516, 4
          %s520 = int_to_ptr.hbm [resolvable:$true] %s519
          %525 = dma.vmem_to_hbm [thread:$0]  %s518, 2048, %s520, [#allocation4], 128, 128, 8
        $region48: #{tpu_custom_call.1} parent=27 // pred_fallthru
          _
        // Predicated region
        $region49: #{tpu_custom_call.1} parent=27 // pred_check
          %p526 = pneg %p106
        $region50: #{tpu_custom_call.1} parent=27 // pred_check_branch
          %528 = sbr.rel (%p526) target = $region52
        $region51: #{tpu_custom_call.1} parent=27 // pred_region
          %530 = dma.done [#allocation4], 2048
        $region52: #{tpu_custom_call.1} parent=27 // pred_fallthru
          _
      $region28: #{tpu_custom_call.1} parent=5 // pred_fallthru
        _
      %p531 = scmp.le.s32.totalorder 2, %s13
      // Predicated region
      $region53: #{tpu_custom_call.1} parent=5 // pred_check
        %p532 = pneg %p531
      $region54: #{tpu_custom_call.1} parent=5 // pred_check_branch
        %534 = sbr.rel (%p532) target = $region56
      $region55: #{tpu_custom_call.1} parent=5 // pred_region
        %s535 = ssub.s32 %s13, 2
      $region56: #{tpu_custom_call.1} parent=5 // pred_fallthru
        _
    $region6: #{tpu_custom_call.1} parent=1 // loop_footer
      %s17 = sadd.s32 1, %s13
    $region7: #{tpu_custom_call.1} parent=1 // loop_footer_branch
      %12 = sbr.rel target = $region3
    $region8: #{tpu_custom_call.1} parent=1 // loop_exit
      _
    %536 = vsyncpa [#allocation3], 1
    %s537 = scalar_lea.sflag [#allocation3], 1
    %538 = vsyncpa %s537, 1
    %539 = vsyncpa [#allocation6], 1
    %540 = vsyncpa [#allocation4], 1
    %s541 = scalar_lea.sflag [#allocation4], 1
    %542 = vsyncpa %s541, 1

</llo_original>
